<compile_context>
chip_gen: v7x
topology: tpu7x:2x2x1
jax: 0.10.0
libtpu: 0.0.40
codegen_flags: <defaults>
</compile_context>

<pallas_src>
import functools
import math

import jax
import jax.numpy as jnp
from jax.experimental import pallas as pl
from jax.experimental.pallas import tpu as pltpu


def _round_up(x, m):
    return ((x + m - 1) // m) * m


def token_embedding_kernel(tok_ref, emb_hbm, out_ref, rows_vmem, sem, *,
                           tokens_per_block, vocab_size, scale):
    """Gather + scale for one block of token ids.

    tok_ref   : (N_pad,) int32 token ids, scalar-prefetched into SMEM.
    emb_hbm   : (V, E) embedding table, left in HBM (memory_space=pl.ANY).
    out_ref   : (TN, E) output block in VMEM (pipeline managed).
    rows_vmem : (TN, E) VMEM scratch that the gathered rows land in.
    sem       : DMA semaphore shared by all row copies of this block.
    """
    i = pl.program_id(0)
    base = i * tokens_per_block

    # Issue TN independent HBM->VMEM row DMAs; all of them are in flight at
    # once, so the HBM round-trip latency is amortized over the whole tile.
    @pl.loop(0, tokens_per_block)
    def _(r):
        tok = tok_ref[base + r]
        # Clamp instead of erroring on out-of-range ids (see header comment).
        tok = jnp.minimum(jnp.maximum(tok, 0), vocab_size - 1)
        pltpu.make_async_copy(emb_hbm.at[tok], rows_vmem.at[r], sem).start()

    # Single wait sized for the whole block: each row copy signals `sem` by
    # its own byte count, so waiting on a descriptor covering the full scratch
    # buffer (src/dst only used for size) waits for all of them.
    pltpu.make_async_copy(rows_vmem, rows_vmem, sem).wait()

    out_ref[...] = (rows_vmem[...].astype(jnp.float32) * scale).astype(out_ref.dtype)


def token_embedding(tokens, emb_table, *, tile_n=256):
    """tokens: [B, S] integer ids; emb_table: [V, E]; returns [B, S, E]."""
    B, S = tokens.shape
    V, E = emb_table.shape
    N = B * S

    # Token tile: large for real workloads, shrunk (to a multiple of 8) when
    # there are only a few tokens so the toy case doesn't gather padding.
    tn = min(tile_n, _round_up(N, 8))
    n_pad = _round_up(N, tn)

    tok_flat = jnp.zeros((n_pad,), jnp.int32).at[:N].set(
        tokens.reshape(N).astype(jnp.int32))
    scale = math.sqrt(E)

    out = pl.pallas_call(
        functools.partial(token_embedding_kernel,
                          tokens_per_block=tn, vocab_size=V, scale=scale),
        out_shape=jax.ShapeDtypeStruct((n_pad, E), emb_table.dtype),
        grid_spec=pltpu.PrefetchScalarGridSpec(
            num_scalar_prefetch=1,                      # token ids -> SMEM
            grid=(n_pad // tn,),
            in_specs=[
                pl.BlockSpec(memory_space=pl.ANY),      # table stays in HBM
            ],
            out_specs=pl.BlockSpec((tn, E), lambda i, tok: (i, 0)),
            scratch_shapes=[
                pltpu.VMEM((tn, E), emb_table.dtype),   # gathered rows
                pltpu.SemaphoreType.DMA(()),            # shared row-copy sem
            ],
        ),
        compiler_params=pltpu.CompilerParams(
            dimension_semantics=("parallel",)),
    )(tok_flat, emb_table)

    return out[:N].reshape(B, S, E)


if __name__ == "__main__":
    vocab_size = 512
    emb_size = 128
    B, S = 2, 8

    key = jax.random.PRNGKey(0)
    k_tok, k_emb = jax.random.split(key)
    tokens = jax.random.randint(k_tok, (B, S), 0, vocab_size, dtype=jnp.int32)
    emb_table = jax.random.normal(k_emb, (vocab_size, emb_size), dtype=jnp.float32)

    out = token_embedding(tokens, emb_table)
    jax.block_until_ready(out)

    # Reference: nn.Embedding gather * sqrt(emb_size)
    ref = jnp.take(emb_table, tokens, axis=0) * math.sqrt(emb_size)
    assert out.shape == (B, S, emb_size)
    assert jnp.allclose(out, ref, atol=1e-5, rtol=1e-5), float(
        jnp.max(jnp.abs(out - ref)))

    print("KERNEL_OK")
</pallas_src>

<mosaic_0001>
module attributes {stable_mosaic.version = 11 : i64} {
  func.func @token_embedding_kernel(%arg0: i32, %arg1: memref<16xi32, #tpu.memory_space<smem>>, %arg2: memref<512x128xf32, #tpu.memory_space<any>>, %arg3: memref<16x128xf32, #tpu.memory_space<vmem>>, %arg4: memref<16x128xf32, #tpu.memory_space<vmem>>, %arg5: memref<!tpu.dma_semaphore, #tpu.memory_space<semaphore_mem>>) attributes {dimension_semantics = [#tpu.dimension_semantics<parallel>], iteration_bounds = array<i64: 1>, scalar_prefetch = 1 : i64, scratch_operands = 2 : i64, tpu.core_type = #tpu.core_type<tc>, window_params = [{}, {transform_indices = @transform_1, window_bounds = array<i64: 16, 128>}]} {
    %c16_i32 = arith.constant 16 : i32
    %0 = arith.muli %arg0, %c16_i32 : i32
    %c0_i32 = arith.constant 0 : i32
    %c16_i32_0 = arith.constant 16 : i32
    %1 = arith.addi %c0_i32, %c16_i32_0 : i32
    %c1_i32 = arith.constant 1 : i32
    scf.for %arg6 = %c0_i32 to %1 step %c1_i32  : i32 {
      %c1_i32_5 = arith.constant 1 : i32
      %6 = arith.muli %arg6, %c1_i32_5 : i32
      %c0_i32_6 = arith.constant 0 : i32
      %7 = arith.addi %c0_i32_6, %6 : i32
      %8 = arith.addi %0, %7 : i32
      %9 = arith.index_cast %8 : i32 to index
      %10 = memref.load %arg1[%9] : memref<16xi32, #tpu.memory_space<smem>>
      %c0_i32_7 = arith.constant 0 : i32
      %11 = arith.maxsi %10, %c0_i32_7 : i32
      %c511_i32 = arith.constant 511 : i32
      %12 = arith.minsi %11, %c511_i32 : i32
      %c0_i32_8 = arith.constant 0 : i32
      %13 = tpu.memref_slice %arg2[%12, %c0_i32_8] : memref<512x128xf32, #tpu.memory_space<any>> -> memref<1x128xf32, #tpu.memory_space<any>>
      %14 = tpu.memref_squeeze %13 : memref<1x128xf32, #tpu.memory_space<any>> -> memref<128xf32, #tpu.memory_space<any>>
      %c0_i32_9 = arith.constant 0 : i32
      %15 = tpu.memref_slice %arg4[%7, %c0_i32_9] : memref<16x128xf32, #tpu.memory_space<vmem>> -> memref<1x128xf32, #tpu.memory_space<vmem>>
      %16 = tpu.memref_squeeze %15 : memref<1x128xf32, #tpu.memory_space<vmem>> -> memref<128xf32, #tpu.memory_space<vmem>>
      tpu.enqueue_dma source(%14 : memref<128xf32, #tpu.memory_space<any>>) target(%16 : memref<128xf32, #tpu.memory_space<vmem>>) target_semaphore(%arg5 : memref<!tpu.dma_semaphore, #tpu.memory_space<semaphore_mem>>)
    }
    %c16_i32_1 = arith.constant 16 : i32
    tpu.wait_dma2 semaphore(%arg5 : memref<!tpu.dma_semaphore, #tpu.memory_space<semaphore_mem>>) src(%arg4 : memref<16x128xf32, #tpu.memory_space<vmem>>) dst(%arg4 : memref<16x128xf32, #tpu.memory_space<vmem>>)
    %c0 = arith.constant 0 : index
    %c0_2 = arith.constant 0 : index
    %2 = vector.load %arg4[%c0, %c0_2] : memref<16x128xf32, #tpu.memory_space<vmem>>, vector<16x128xf32>
    %cst = arith.constant 11.3137083 : f32
    %3 = vector.broadcast %cst : f32 to vector<16x128xf32>
    %4 = arith.mulf %2, %3 : vector<16x128xf32>
    %c0_3 = arith.constant 0 : index
    %c0_4 = arith.constant 0 : index
    %5 = vector.load %arg3[%c0_3, %c0_4] : memref<16x128xf32, #tpu.memory_space<vmem>>, vector<16x128xf32>
    tpu.vector_store %arg3[%c0_3, %c0_4], %4 {strides = array<i32>} : memref<16x128xf32, #tpu.memory_space<vmem>>, vector<16x128xf32>,
    return
  }
  func.func @transform_1(%arg0: i32, %arg1: memref<16xi32, #tpu.memory_space<smem>>) -> (i32, i32) {
    %c0_i32 = arith.constant 0 : i32
    %c0_i32_0 = arith.constant 0 : i32
    return %arg0, %c0_i32 : i32, i32
  }
}

</mosaic_0001>

<llo_original>
// kernel: tpu_custom_call.1
$region0: #{tpu_custom_call.1}
  #allocation0 [shape = 'u32[]', space=smem, size = 0x4, offset = 0x4, fixed_abs, tag = 'smem constant byte address 0x4 - core index']
  #allocation1 [shape = 'u32[144,128]{1,0:T(1,128)}', space=vmem, size = 0x12000, scoped, tag = 'internal scratch']
  #allocation2 [shape = 'f32[16,128]{1,0:T(8,128)}', space=vmem, size = 0x2000, scoped, tag = 'scratch operand']
  #allocation3 [shape = 's32[1]{0}', space=sflag, size = 0x4, scoped, tag = 'scratch operand']
  #allocation4 [shape = 's32[1]{0}', space=sflag, size = 0x4, scoped, tag = 'scoped memory for tpu_custom_call.1']
  #allocation5 [shape = 'u8[512]{0}', space=smem, size = 0x200, scoped, tag = 'prefetched SMEM operand 0']
  #allocation8 [shape = 's32[]', space=sflag, size = 0x4, offset = 0, fixed_abs, tag = 'sflag constant byte address 0x0 - dummy sync flag']
  #allocation9 [shape = 's32[]', space=sflag, size = 0x4, offset = 0, fixed_abs, tag = 'sflag constant byte address 0x0 - dummy sync flag']
  #allocation10 [shape = 'u32[]', space=smem, size = 0x4, offset = 0x44, fixed_abs, tag = 'smem constant byte address 0x44 - assertion arg 0']
  #allocation11 [shape = 'u32[]', space=smem, size = 0x4, offset = 0x48, fixed_abs, tag = 'smem constant byte address 0x48 - assertion arg 1']
  %s0 = inlined_call_operand.hbm [shape: s32[16], index: 0, kind: input, shape index: {}]
  %s1 = inlined_call_operand.hbm [shape: f32[512,128], index: 1, kind: input, shape index: {}]
  %s2 = inlined_call_operand.hbm [shape: f32[16,128], index: 2, kind: output, shape index: {}]
  %s3 = sld [smem:[#allocation0]]
  $region21: #{tpu_custom_call.1} parent=0
    _
  %s5 = ssub.s32 1, %s3
  %s6 = scalar_select 0, %s5, %s3
  %8 = dma.hbm_to_smem %s0, 16, [#allocation5], [#allocation4]
  %9 = dma.done [#allocation4], 16
  %10 = sfence
  $region1: #{tpu_custom_call.1} parent=0
    #allocation6 [shape = 'u8[8192]{0}', space=vmem, size = 0x2000, scoped, tag = 'output window, operand 0, single buffered']
    #allocation7 [shape = 's32[1]{0}', space=sflag, size = 0x4, scoped, tag = 'scoped memory for tpu_custom_call.1']
    %11 = vsyncpa [#allocation7], 0
    %s12 = smul.u32 0, 16
    loop: start=0, step=1, limit=16
    $region2: #{tpu_custom_call.1} parent=1 // loop_pre_header
      _
    $region3: #{tpu_custom_call.1} parent=1 // loop_header
      %s14 = sphi 0, %s18
      %p15 = scmp.ge.s32.totalorder %s14, 16
    $region4: #{tpu_custom_call.1} parent=1 // loop_header_branch
      %17 = sbr.rel (%p15) target = $region8
    $region5: #{tpu_custom_call.1} parent=1 // loop_body
      %s19 = sadd.s32 %s12, %s14
      %s20 = sld [smem:[#allocation5 + %s19]]
      %p21 = scmp.gt.s32.totalorder %s20, 0
      %s22 = scalar_select %p21, %s20, 0
      %p23 = scmp.lt.s32.totalorder %s22, 511
      %s24 = scalar_select %p23, %s22, 511
      %s25 = smul.addr %s24, 16
      %s26 = scalar_lea.hbm %s1, %s25
      %s27 = scalar_lea.vmem [#allocation2], %s14
      // Predicated region
      $region9: #{tpu_custom_call.1} parent=5 // pred_check
        _
      $region10: #{tpu_custom_call.1} parent=5 // pred_check_branch
        %29 = sbr.rel target = $region12
      $region11: #{tpu_custom_call.1} parent=5 // pred_region
        %30 = sst [smem:[#allocation10]] [#allocation9]
        %31 = sst [smem:[#allocation11]] [#allocation8]
      $region12: #{tpu_custom_call.1} parent=5 // pred_fallthru
        _
      %33 = shalt.err (0)
      %s35 = sshll.u32 %s27, 4
      %s36 = int_to_ptr.vmem [resolvable:$true] %s35
      %38 = dma.hbm_to_vmem [thread:$0]  %s26, 16, %s36, [#allocation3]
    $region6: #{tpu_custom_call.1} parent=1 // loop_footer
      %s18 = sadd.s32 1, %s14
    $region7: #{tpu_custom_call.1} parent=1 // loop_footer_branch
      %13 = sbr.rel target = $region3
    $region8: #{tpu_custom_call.1} parent=1 // loop_exit
      _
    %s39 = smul.u32 16, 1
    %s40 = sshll.u32 %s39, 4
    %41 = dma.done [#allocation3], %s40
    %v42 = vld [vmem:[#allocation2] sm:$0xff]
    %v43 = vld [vmem:[#allocation2 + $0x8] sm:$0xff]
    %v44 = vmul.f32 %v42, 11.313708
    %v45 = vmul.f32 %v43, 11.313708
    %46 = vst [vmem:[#allocation6] sm:$0xff] %v44
    %47 = vst [vmem:[#allocation6 + $0x8] sm:$0xff] %v45
    // Predicated region
    $region13: #{tpu_custom_call.1} parent=1 // pred_check
      _
    $region14: #{tpu_custom_call.1} parent=1 // pred_check_branch
      %49 = sbr.rel (0) target = $region16
    $region15: #{tpu_custom_call.1} parent=1 // pred_region
      %s51 = ssub.s32 256, 256
      %52 = vsyncadd [#allocation7], %s51
      %s53 = sshll.u32 [#allocation6], 4
      %s54 = int_to_ptr.vmem [resolvable:$true] %s53
      %59 = dma.vmem_to_hbm [thread:$0]  %s54, 256, %s2, [#allocation7], 128, 128, 8
    $region16: #{tpu_custom_call.1} parent=1 // pred_fallthru
      _
    // Predicated region
    $region17: #{tpu_custom_call.1} parent=1 // pred_check
      _
    $region18: #{tpu_custom_call.1} parent=1 // pred_check_branch
      %61 = sbr.rel (0) target = $region20
    $region19: #{tpu_custom_call.1} parent=1 // pred_region
      %62 = dma.done [#allocation7], 256
    $region20: #{tpu_custom_call.1} parent=1 // pred_fallthru
      _
    %63 = vsyncpa [#allocation7], 1
  %64 = vsyncmov [#allocation3]
  %s65 = vpop.sfrf %64
  %p66 = scmp.eq.s32.totalorder %s65, 0
  %p67 = pneg %p66
  %69 = shalt.err (%p67)

</llo_original>
